<compile_context>
chip_gen: v6e
topology: v6e:2x2x1
jax: 0.10.0
libtpu: 0.0.40
codegen_flags: <defaults>
</compile_context>

<pallas_src>
import functools

import numpy as np
import jax
import jax.numpy as jnp
from jax.experimental import pallas as pl
from jax.experimental.pallas import tpu as pltpu

EPS = 1e-5


def _boundary_mask(H, W, C_in, KH, KW):
    """(KH*KW*C_in, H*W) f32 mask: 1 where the shifted tap is inside the image."""
    HW = H * W
    rows = np.arange(HW) // W
    cols = np.arange(HW) % W
    pad_h = (KH - 1) // 2
    pad_w = (KW - 1) // 2
    taps = []
    for kh in range(KH):
        dh = kh - pad_h
        for kw in range(KW):
            dw = kw - pad_w
            valid = ((rows + dh >= 0) & (rows + dh < H)
                     & (cols + dw >= 0) & (cols + dw < W))
            taps.append(np.repeat(valid[None, :], C_in, axis=0))
    return np.concatenate(taps, axis=0).astype(np.float32)


def _unet_layer_kernel(x_ref, w_ref, m_ref, o_ref, *, H, W, C_in, C_out, KH, KW):
    # x_ref: (1, C_in, H*W)  lane-major activation of one sample
    # w_ref: (C_out, KH*KW*C_in)  im2col weight matrix
    # m_ref: (KH*KW*C_in, H*W)    boundary mask (zero-padding of the conv)
    # o_ref: (1, C_out, H*W)
    del C_out  # implied by w_ref/o_ref shapes
    HW = H * W
    x = x_ref[0].astype(jnp.float32)                       # (C_in, HW)

    # ---- InstanceNorm2d (affine=False): fused single pass over x
    inv_hw = 1.0 / float(HW)
    s1 = jnp.sum(x, axis=1, keepdims=True)                 # (C_in, 1)
    s2 = jnp.sum(x * x, axis=1, keepdims=True)
    mean = s1 * inv_hw
    var = jnp.maximum(s2 * inv_hw - mean * mean, 0.0)      # clamp E[x^2]-m^2 >= 0
    # ---- ReLU fused with the normalization
    a = jnp.maximum((x - mean) * jax.lax.rsqrt(var + EPS), 0.0)

    # ---- 3x3 conv (pad=1, no bias) as a single im2col matmul.
    # Build the 9 shifted views with lane rolls (kept entirely in vregs),
    # stack them on sublanes, and zero out-of-image taps with the mask.
    pad_h = (KH - 1) // 2
    pad_w = (KW - 1) // 2
    taps = []
    for kh in range(KH):
        dh = kh - pad_h
        for kw in range(KW):
            dw = kw - pad_w
            d = dh * W + dw                               # shifted[p] = a[p + d]
            taps.append(a if d == 0 else pltpu.roll(a, shift=(-d) % HW, axis=1))
    patch = jnp.concatenate(taps, axis=0) * m_ref[...]     # (KH*KW*C_in, HW)

    # One MXU matmul, register accumulation, single lane-dense store.
    y = jnp.dot(w_ref[...], patch, preferred_element_type=jnp.float32)  # (C_out, HW)
    o_ref[0] = y.astype(o_ref.dtype)


def unet_layer_forward(x_nchw, weight_oihw):
    """x_nchw: (N, C_in, H, W) float32; weight_oihw: (C_out, C_in, KH, KW)."""
    N, C_in, H, W = x_nchw.shape
    C_out, _, KH, KW = weight_oihw.shape
    HW = H * W

    # Lane-major activations: (N, C_in, H*W) -- contiguous reshape, free.
    x_flat = x_nchw.reshape(N, C_in, HW)
    # im2col weight matrix: columns ordered (kh, kw, ci) to match the kernel's
    # tap stacking order.
    w_mat = jnp.transpose(weight_oihw, (0, 2, 3, 1)).reshape(C_out, KH * KW * C_in)
    mask = jnp.asarray(_boundary_mask(H, W, C_in, KH, KW))

    kernel = functools.partial(_unet_layer_kernel,
                               H=H, W=W, C_in=C_in, C_out=C_out, KH=KH, KW=KW)

    out_flat = pl.pallas_call(
        kernel,
        out_shape=jax.ShapeDtypeStruct((N, C_out, HW), x_nchw.dtype),
        grid_spec=pltpu.PrefetchScalarGridSpec(
            num_scalar_prefetch=0,
            grid=(N,),
            in_specs=[
                pl.BlockSpec((1, C_in, HW), lambda n: (n, 0, 0)),
                pl.BlockSpec((C_out, KH * KW * C_in), lambda n: (0, 0)),
                pl.BlockSpec((KH * KW * C_in, HW), lambda n: (0, 0)),
            ],
            out_specs=pl.BlockSpec((1, C_out, HW), lambda n: (n, 0, 0)),
        ),
        compiler_params=pltpu.CompilerParams(dimension_semantics=("parallel",)),
    )(x_flat, w_mat, mask)

    # Back to PyTorch NCHW convention -- contiguous reshape, free.
    return out_flat.reshape(N, C_out, H, W)


def _reference_forward(x_nchw, weight_oihw):
    """Pure-JAX reference of the same forward (for correctness check)."""
    x = x_nchw.astype(jnp.float32)
    mean = jnp.mean(x, axis=(2, 3), keepdims=True)
    var = jnp.mean((x - mean) ** 2, axis=(2, 3), keepdims=True)
    a = jnp.maximum((x - mean) * jax.lax.rsqrt(var + EPS), 0.0)
    y = jax.lax.conv_general_dilated(
        a, weight_oihw, window_strides=(1, 1), padding=((1, 1), (1, 1)),
        dimension_numbers=("NCHW", "OIHW", "NCHW"))
    return y.astype(x_nchw.dtype)


if __name__ == "__main__":
    # Small shapes consistent with the module: N=2, C_in=4, C_out=8, H=W=16
    N, C_in, C_out, H, W, K = 2, 4, 8, 16, 16, 3

    key = jax.random.PRNGKey(0)
    kx, kw = jax.random.split(key)
    x = jax.random.normal(kx, (N, C_in, H, W), dtype=jnp.float32)
    # Deterministic synthetic conv weight (Conv2d bias=False since norm_type given)
    weight = jax.random.normal(kw, (C_out, C_in, K, K), dtype=jnp.float32) * 0.1

    y = unet_layer_forward(x, weight)
    y = jax.block_until_ready(y)

    y_ref = _reference_forward(x, weight)
    assert y.shape == (N, C_out, H, W)
    assert jnp.allclose(y, y_ref, atol=1e-3, rtol=1e-3), \
        f"max abs err {jnp.max(jnp.abs(y - y_ref))}"

    print("KERNEL_OK")
</pallas_src>

<mosaic_0001>
module attributes {stable_mosaic.version = 11 : i64} {
  func.func @_unet_layer_kernel(%arg0: i32, %arg1: memref<1x4x256xf32, #tpu.memory_space<vmem>>, %arg2: memref<8x36xf32, #tpu.memory_space<vmem>>, %arg3: memref<36x256xf32, #tpu.memory_space<vmem>>, %arg4: memref<1x8x256xf32, #tpu.memory_space<vmem>>) attributes {dimension_semantics = [#tpu.dimension_semantics<parallel>], iteration_bounds = array<i64: 2>, scalar_prefetch = 0 : i64, scratch_operands = 0 : i64, tpu.core_type = #tpu.core_type<tc>, window_params = [{transform_indices = @transform_0, window_bounds = array<i64: 1, 4, 256>}, {pipeline_mode = #tpu.pipeline_mode<synchronous>, transform_indices = @transform_1, window_bounds = array<i64: 8, 36>}, {pipeline_mode = #tpu.pipeline_mode<synchronous>, transform_indices = @transform_2, window_bounds = array<i64: 36, 256>}, {transform_indices = @transform_3, window_bounds = array<i64: 1, 8, 256>}]} {
    %c0 = arith.constant 0 : index
    %c0_0 = arith.constant 0 : index
    %c0_1 = arith.constant 0 : index
    %0 = vector.load %arg1[%c0, %c0_0, %c0_1] : memref<1x4x256xf32, #tpu.memory_space<vmem>>, vector<1x4x256xf32>
    %1 = vector.shape_cast %0 : vector<1x4x256xf32> to vector<4x256xf32>
    %cst = arith.constant dense<0.000000e+00> : vector<4xf32>
    %2 = vector.multi_reduction <add>, %1, %cst [1] : vector<4x256xf32> to vector<4xf32>
    %3 = vector.shape_cast %2 : vector<4xf32> to vector<4x1xf32>
    %4 = arith.mulf %1, %1 : vector<4x256xf32>
    %cst_2 = arith.constant dense<0.000000e+00> : vector<4xf32>
    %5 = vector.multi_reduction <add>, %4, %cst_2 [1] : vector<4x256xf32> to vector<4xf32>
    %6 = vector.shape_cast %5 : vector<4xf32> to vector<4x1xf32>
    %cst_3 = arith.constant 3.906250e-03 : f32
    %7 = vector.broadcast %cst_3 : f32 to vector<4x1xf32>
    %8 = arith.mulf %3, %7 : vector<4x1xf32>
    %cst_4 = arith.constant 3.906250e-03 : f32
    %9 = vector.broadcast %cst_4 : f32 to vector<4x1xf32>
    %10 = arith.mulf %6, %9 : vector<4x1xf32>
    %11 = arith.mulf %8, %8 : vector<4x1xf32>
    %12 = arith.subf %10, %11 : vector<4x1xf32>
    %cst_5 = arith.constant 0.000000e+00 : f32
    %13 = vector.broadcast %cst_5 : f32 to vector<4x1xf32>
    %14 = arith.maximumf %12, %13 : vector<4x1xf32>
    %15 = vector.broadcast %8 : vector<4x1xf32> to vector<4x256xf32>
    %16 = arith.subf %1, %15 : vector<4x256xf32>
    %cst_6 = arith.constant 9.99999974E-6 : f32
    %17 = vector.broadcast %cst_6 : f32 to vector<4x1xf32>
    %18 = arith.addf %14, %17 : vector<4x1xf32>
    %19 = math.rsqrt %18 : vector<4x1xf32>
    %20 = vector.broadcast %19 : vector<4x1xf32> to vector<4x256xf32>
    %21 = arith.mulf %16, %20 : vector<4x256xf32>
    %cst_7 = arith.constant 0.000000e+00 : f32
    %22 = vector.broadcast %cst_7 : f32 to vector<4x256xf32>
    %23 = arith.maximumf %21, %22 : vector<4x256xf32>
    %c17_i32 = arith.constant 17 : i32
    %24 = tpu.dynamic_rotate %23 by %c17_i32 dim 1 : vector<4x256xf32>, i32 -> vector<4x256xf32>
    %c16_i32 = arith.constant 16 : i32
    %25 = tpu.dynamic_rotate %23 by %c16_i32 dim 1 : vector<4x256xf32>, i32 -> vector<4x256xf32>
    %c15_i32 = arith.constant 15 : i32
    %26 = tpu.dynamic_rotate %23 by %c15_i32 dim 1 : vector<4x256xf32>, i32 -> vector<4x256xf32>
    %c1_i32 = arith.constant 1 : i32
    %27 = tpu.dynamic_rotate %23 by %c1_i32 dim 1 : vector<4x256xf32>, i32 -> vector<4x256xf32>
    %c255_i32 = arith.constant 255 : i32
    %28 = tpu.dynamic_rotate %23 by %c255_i32 dim 1 : vector<4x256xf32>, i32 -> vector<4x256xf32>
    %c241_i32 = arith.constant 241 : i32
    %29 = tpu.dynamic_rotate %23 by %c241_i32 dim 1 : vector<4x256xf32>, i32 -> vector<4x256xf32>
    %c240_i32 = arith.constant 240 : i32
    %30 = tpu.dynamic_rotate %23 by %c240_i32 dim 1 : vector<4x256xf32>, i32 -> vector<4x256xf32>
    %c239_i32 = arith.constant 239 : i32
    %31 = tpu.dynamic_rotate %23 by %c239_i32 dim 1 : vector<4x256xf32>, i32 -> vector<4x256xf32>
    %32 = tpu.concatenate %24, %25, %26, %27, %23, %28, %29, %30, %31 in 0 : vector<4x256xf32>, vector<4x256xf32>, vector<4x256xf32>, vector<4x256xf32>, vector<4x256xf32>, vector<4x256xf32>, vector<4x256xf32>, vector<4x256xf32>, vector<4x256xf32> -> vector<36x256xf32>
    %c0_8 = arith.constant 0 : index
    %c0_9 = arith.constant 0 : index
    %33 = vector.load %arg3[%c0_8, %c0_9] : memref<36x256xf32, #tpu.memory_space<vmem>>, vector<36x256xf32>
    %34 = arith.mulf %32, %33 : vector<36x256xf32>
    %c0_10 = arith.constant 0 : index
    %c0_11 = arith.constant 0 : index
    %35 = vector.load %arg2[%c0_10, %c0_11] : memref<8x36xf32, #tpu.memory_space<vmem>>, vector<8x36xf32>
    %cst_12 = arith.constant dense<0.000000e+00> : vector<8x256xf32>
    %36 = tpu.matmul %35, %34, %cst_12 {dimension_numbers = #tpu.dot_dimension_numbers<[1], [0], [0], [1], [0, 0, 1, 1], [], []>} : vector<8x36xf32>, vector<36x256xf32>, vector<8x256xf32> -> vector<8x256xf32>
    %c0_13 = arith.constant 0 : index
    %c0_14 = arith.constant 0 : index
    %c0_15 = arith.constant 0 : index
    %37 = vector.load %arg4[%c0_13, %c0_14, %c0_15] : memref<1x8x256xf32, #tpu.memory_space<vmem>>, vector<1x8x256xf32>
    %38 = vector.shape_cast %37 : vector<1x8x256xf32> to vector<8x256xf32>
    %39 = vector.shape_cast %36 : vector<8x256xf32> to vector<1x8x256xf32>
    tpu.vector_store %arg4[%c0_13, %c0_14, %c0_15], %39 {strides = array<i32>} : memref<1x8x256xf32, #tpu.memory_space<vmem>>, vector<1x8x256xf32>,
    return
  }
  func.func @transform_0(%arg0: i32) -> (i32, i32, i32) {
    %c0_i32 = arith.constant 0 : i32
    %c0_i32_0 = arith.constant 0 : i32
    %c0_i32_1 = arith.constant 0 : i32
    return %arg0, %c0_i32, %c0_i32_0 : i32, i32, i32
  }
  func.func @transform_1(%arg0: i32) -> (i32, i32) {
    %c0_i32 = arith.constant 0 : i32
    %c0_i32_0 = arith.constant 0 : i32
    %c0_i32_1 = arith.constant 0 : i32
    return %c0_i32, %c0_i32_0 : i32, i32
  }
  func.func @transform_2(%arg0: i32) -> (i32, i32) {
    %c0_i32 = arith.constant 0 : i32
    %c0_i32_0 = arith.constant 0 : i32
    %c0_i32_1 = arith.constant 0 : i32
    return %c0_i32, %c0_i32_0 : i32, i32
  }
  func.func @transform_3(%arg0: i32) -> (i32, i32, i32) {
    %c0_i32 = arith.constant 0 : i32
    %c0_i32_0 = arith.constant 0 : i32
    %c0_i32_1 = arith.constant 0 : i32
    return %arg0, %c0_i32, %c0_i32_0 : i32, i32, i32
  }
}

</mosaic_0001>

<llo_original>
// kernel: tpu_custom_call.1
$region0: #{tpu_custom_call.1}
  #allocation0 [shape = 'u32[]', space=smem, size = 0x4, offset = 0x4, fixed_abs, tag = 'smem constant byte address 0x4 - core index']
  #allocation1 [shape = 'u32[144,128]{1,0:T(1,128)}', space=vmem, size = 0x12000, scoped, tag = 'internal scratch']
  %s0 = inlined_call_operand.hbm [shape: f32[2,4,256], index: 0, kind: input, shape index: {}]
  %s1 = inlined_call_operand.hbm [shape: f32[8,36], index: 1, kind: input, shape index: {}]
  %s2 = inlined_call_operand.hbm [shape: f32[36,256], index: 2, kind: input, shape index: {}]
  %s3 = inlined_call_operand.hbm [shape: f32[2,8,256], index: 3, kind: output, shape index: {}]
  %s4 = sld [smem:[#allocation0]]
  $region57: #{tpu_custom_call.1} parent=0
    _
  %s6 = ssub.s32 1, %s4
  %s7 = scalar_select 0, %s6, %s4
  $region1: #{tpu_custom_call.1} parent=0
    #allocation2 [shape = 'u8[8192]{0}', space=vmem, size = 0x2000, scoped, tag = 'input window, operand 0']
    #allocation3 [shape = 's32[2]{0}', space=sflag, size = 0x8, scoped, tag = 'scoped memory for tpu_custom_call.1']
    #allocation4 [shape = 's32[2]{0}', space=sflag, size = 0x8, scoped, tag = 'scoped memory for tpu_custom_call.1']
    #allocation5 [shape = 'u8[4096]{0}', space=vmem, size = 0x1000, scoped, tag = 'input window, operand 1, single buffered']
    #allocation6 [shape = 's32[1]{0}', space=sflag, size = 0x4, scoped, tag = 'scoped memory for tpu_custom_call.1']
    #allocation7 [shape = 'u8[40960]{0}', space=vmem, size = 0xa000, scoped, tag = 'input window, operand 2, single buffered']
    #allocation8 [shape = 'u8[16384]{0}', space=vmem, size = 0x4000, scoped, tag = 'output window, operand 0']
    %8 = vsyncpa [#allocation3], 0
    %s9 = scalar_lea.sflag [#allocation3], 1
    %10 = vsyncpa %s9, 0
    %11 = vsyncpa [#allocation6], 0
    %12 = vsyncpa [#allocation4], 0
    %s13 = scalar_lea.sflag [#allocation4], 1
    %14 = vsyncpa %s13, 0
    loop: start=0, step=1, limit=4
    $region2: #{tpu_custom_call.1} parent=1 // loop_pre_header
      _
    $region3: #{tpu_custom_call.1} parent=1 // loop_header
      %s16 = sphi 0, %s20
      %p17 = scmp.ge.s32.totalorder %s16, 4
      %s26 = sphi 0, %s28
      %s29 = sphi 0, %s26
      %s30 = sphi 0, %s29
      %s46 = sphi 0, %s30
      %s50 = sphi 0, %s50
      %s52 = sphi 0, %s50
      %s53 = sphi 0, %s52
      %s67 = sphi 0, %s53
      %s71 = sphi 0, %s71
      %s73 = sphi 0, %s71
      %s74 = sphi 0, %s73
      %s88 = sphi 0, %s74
      %s94 = sphi 0, %s96
      %s97 = sphi 0, %s94
      %s98 = sphi 0, %s97
      %s114 = sphi 0, %s98
    $region4: #{tpu_custom_call.1} parent=1 // loop_header_branch
      %19 = sbr.rel (%p17) target = $region8
    $region5: #{tpu_custom_call.1} parent=1 // loop_body
      %s21 = ssub.s32 %s16, 1
      %s22 = ssub.s32 %s16, 2
      %s23 = sadd.s32 %s16, 1
      %s24 = ssub.s32 %s16, %s23
      %p25 = scmp.eq.s32.totalorder %s24, 0
      %s27 = sadd.s32 %s26, 1
      %s28 = scalar_select %p25, %s26, %s27
      %p31 = pneg %p25
      %p32 = scmp.eq.s32.totalorder %s16, 1
      %p33 = por %p31, %p32
      %p34 = scmp.ne.s32.totalorder %s26, %s29
      %p35 = scmp.eq.s32.totalorder %s16, 0
      %p36 = por %p34, %p35
      %p37 = scmp.ne.s32.totalorder %s26, %s29
      %p38 = scmp.eq.s32.totalorder %s21, 1
      %p39 = por %p37, %p38
      %p40 = scmp.ne.s32.totalorder %s29, %s30
      %p41 = scmp.eq.s32.totalorder %s21, 0
      %p42 = por %p40, %p41
      %p43 = scmp.ne.s32.totalorder %s29, %s30
      %p44 = scmp.eq.s32.totalorder %s22, 1
      %p45 = por %p43, %p44
      %p47 = scmp.ne.s32.totalorder %s30, %s46
      %p48 = scmp.eq.s32.totalorder %s22, 0
      %p49 = por %p47, %p48
      %s51 = sadd.s32 %s50, 1
      %p54 = scmp.eq.s32.totalorder %s16, 1
      %p55 = scmp.ne.s32.totalorder %s50, %s52
      %p56 = scmp.eq.s32.totalorder %s16, 0
      %p57 = por %p55, %p56
      %p58 = scmp.ne.s32.totalorder %s50, %s52
      %p59 = scmp.eq.s32.totalorder %s21, 1
      %p60 = por %p58, %p59
      %p61 = scmp.ne.s32.totalorder %s52, %s53
      %p62 = scmp.eq.s32.totalorder %s21, 0
      %p63 = por %p61, %p62
      %p64 = scmp.ne.s32.totalorder %s52, %s53
      %p65 = scmp.eq.s32.totalorder %s22, 1
      %p66 = por %p64, %p65
      %p68 = scmp.ne.s32.totalorder %s53, %s67
      %p69 = scmp.eq.s32.totalorder %s22, 0
      %p70 = por %p68, %p69
      %s72 = sadd.s32 %s71, 1
      %p75 = scmp.eq.s32.totalorder %s16, 1
      %p76 = scmp.ne.s32.totalorder %s71, %s73
      %p77 = scmp.eq.s32.totalorder %s16, 0
      %p78 = por %p76, %p77
      %p79 = scmp.ne.s32.totalorder %s71, %s73
      %p80 = scmp.eq.s32.totalorder %s21, 1
      %p81 = por %p79, %p80
      %p82 = scmp.ne.s32.totalorder %s73, %s74
      %p83 = scmp.eq.s32.totalorder %s21, 0
      %p84 = por %p82, %p83
      %p85 = scmp.ne.s32.totalorder %s73, %s74
      %p86 = scmp.eq.s32.totalorder %s22, 1
      %p87 = por %p85, %p86
      %p89 = scmp.ne.s32.totalorder %s74, %s88
      %p90 = scmp.eq.s32.totalorder %s22, 0
      %p91 = por %p89, %p90
      %s92 = ssub.s32 %s16, %s23
      %p93 = scmp.eq.s32.totalorder %s92, 0
      %s95 = sadd.s32 %s94, 1
      %s96 = scalar_select %p93, %s94, %s95
      %p99 = pneg %p93
      %p100 = scmp.eq.s32.totalorder %s16, 1
      %p101 = por %p99, %p100
      %p102 = scmp.ne.s32.totalorder %s94, %s97
      %p103 = scmp.eq.s32.totalorder %s16, 0
      %p104 = por %p102, %p103
      %p105 = scmp.ne.s32.totalorder %s94, %s97
      %p106 = scmp.eq.s32.totalorder %s21, 1
      %p107 = por %p105, %p106
      %p108 = scmp.ne.s32.totalorder %s97, %s98
      %p109 = scmp.eq.s32.totalorder %s21, 0
      %p110 = por %p108, %p109
      %p111 = scmp.ne.s32.totalorder %s97, %s98
      %p112 = scmp.eq.s32.totalorder %s22, 1
      %p113 = por %p111, %p112
      %p115 = scmp.ne.s32.totalorder %s98, %s114
      %p116 = scmp.eq.s32.totalorder %s22, 0
      %p117 = por %p115, %p116
      %p118 = scmp.le.s32.totalorder 1, %s16
      %p119 = scmp.lt.s32.totalorder %s16, 3
      %p120 = pnand %p118, %p119
      %p121 = pneg %p120
      // Predicated region
      $region9: #{tpu_custom_call.1} parent=5 // pred_check
        _
      $region10: #{tpu_custom_call.1} parent=5 // pred_check_branch
        %123 = sbr.rel (%p120) target = $region12
      $region11: #{tpu_custom_call.1} parent=5 // pred_region
        %s124 = ssub.s32 %s16, 1
        // Predicated region
        $region13: #{tpu_custom_call.1} parent=11 // pred_check
          %p125 = pneg %p63
        $region14: #{tpu_custom_call.1} parent=11 // pred_check_branch
          %127 = sbr.rel (%p125) target = $region16
        $region15: #{tpu_custom_call.1} parent=11 // pred_region
          %s129 = ssub.s32 128, 128
          %130 = vsyncadd [#allocation6], %s129
          %s132 = sshll.u32 [#allocation5], 4
          %s133 = int_to_ptr.vmem [resolvable:$true] %s132
          %135 = dma.hbm_to_vmem [thread:$0]  %s1, 128, %s133, [#allocation6]
        $region16: #{tpu_custom_call.1} parent=11 // pred_fallthru
          _
        // Predicated region
        $region17: #{tpu_custom_call.1} parent=11 // pred_check
          %p136 = pneg %p84
        $region18: #{tpu_custom_call.1} parent=11 // pred_check_branch
          %138 = sbr.rel (%p136) target = $region20
        $region19: #{tpu_custom_call.1} parent=11 // pred_region
          %s140 = ssub.s32 1280, 1280
          %141 = vsyncadd [#allocation6], %s140
          %s142 = sshll.u32 [#allocation7], 4
          %s143 = int_to_ptr.vmem [resolvable:$true] %s142
          %148 = dma.hbm_to_vmem [thread:$0]  %s2, 1280, %s143, [#allocation6], 256, 256, 16
        $region20: #{tpu_custom_call.1} parent=11 // pred_fallthru
          _
      $region12: #{tpu_custom_call.1} parent=5 // pred_fallthru
        _
      %p149 = scmp.lt.s32.totalorder %s16, 2
      // Predicated region
      $region21: #{tpu_custom_call.1} parent=5 // pred_check
        %p150 = pneg %p149
      $region22: #{tpu_custom_call.1} parent=5 // pred_check_branch
        %152 = sbr.rel (%p150) target = $region24
      $region23: #{tpu_custom_call.1} parent=5 // pred_region
        // Predicated region
        $region25: #{tpu_custom_call.1} parent=23 // pred_check
          %p153 = pneg %p36
        $region26: #{tpu_custom_call.1} parent=23 // pred_check_branch
          %155 = sbr.rel (%p153) target = $region28
        $region27: #{tpu_custom_call.1} parent=23 // pred_region
          %s156 = sand.u32 %s26, 1
          %s157 = scalar_lea.sflag [#allocation3], %s156
          %s158 = sand.u32 %s26, 1
          %s159 = smul.addr %s158, 8
          %s160 = scalar_lea.vmem [#allocation2], %s159
          %s162 = ssub.s32 128, 128
          %163 = vsyncadd %s157, %s162
          %s164 = smul.addr %s16, 2
          %s165 = smul.addr %s164, 64
          %s166 = scalar_lea.hbm %s0, %s165
          %s168 = sshll.u32 %s160, 4
          %s169 = int_to_ptr.vmem [resolvable:$true] %s168
          %171 = dma.hbm_to_vmem [thread:$0]  %s166, 128, %s169, %s157
        $region28: #{tpu_custom_call.1} parent=23 // pred_fallthru
          _
      $region24: #{tpu_custom_call.1} parent=5 // pred_fallthru
        _
      %p172 = scmp.le.s32.totalorder 1, %s16
      %p173 = scmp.lt.s32.totalorder %s16, 3
      %p174 = pnand %p172, %p173
      %p175 = pneg %p174
      // Predicated region
      $region29: #{tpu_custom_call.1} parent=5 // pred_check
        _
      $region30: #{tpu_custom_call.1} parent=5 // pred_check_branch
        %177 = sbr.rel (%p174) target = $region32
      $region31: #{tpu_custom_call.1} parent=5 // pred_region
        %s178 = ssub.s32 %s16, 1
        %s179 = sand.u32 %s29, 1
        %s180 = scalar_lea.sflag [#allocation3], %s179
        %s181 = sand.u32 %s29, 1
        %s182 = smul.addr %s181, 8
        %s183 = scalar_lea.vmem [#allocation2], %s182
        // Predicated region
        $region33: #{tpu_custom_call.1} parent=31 // pred_check
          %p184 = pneg %p42
        $region34: #{tpu_custom_call.1} parent=31 // pred_check_branch
          %186 = sbr.rel (%p184) target = $region36
        $region35: #{tpu_custom_call.1} parent=31 // pred_region
          %187 = dma.done %s180, 128
        $region36: #{tpu_custom_call.1} parent=31 // pred_fallthru
          _
        // Predicated region
        $region37: #{tpu_custom_call.1} parent=31 // pred_check
          %p188 = pneg %p63
        $region38: #{tpu_custom_call.1} parent=31 // pred_check_branch
          %190 = sbr.rel (%p188) target = $region40
        $region39: #{tpu_custom_call.1} parent=31 // pred_region
          %191 = dma.done [#allocation6], 128
        $region40: #{tpu_custom_call.1} parent=31 // pred_fallthru
          _
        // Predicated region
        $region41: #{tpu_custom_call.1} parent=31 // pred_check
          %p192 = pneg %p84
        $region42: #{tpu_custom_call.1} parent=31 // pred_check_branch
          %194 = sbr.rel (%p192) target = $region44
        $region43: #{tpu_custom_call.1} parent=31 // pred_region
          %195 = dma.done [#allocation6], 1280
        $region44: #{tpu_custom_call.1} parent=31 // pred_fallthru
          _
        %s196 = sand.u32 %s29, 1
        %s197 = scalar_lea.sflag [#allocation3], %s196
        %s198 = sand.u32 %s29, 1
        %s199 = smul.addr %s198, 8
        %s200 = scalar_lea.vmem [#allocation2], %s199
        %p201 = pneg %p42
        %p202 = pneg %p39
        %p203 = pneg %p63
        %p204 = pneg %p60
        %p205 = pneg %p84
        %p206 = pneg %p81
        %p207 = pneg %p110
        %p208 = pneg %p107
        %s209 = sand.u32 %s97, 1
        %s210 = scalar_lea.sflag [#allocation4], %s209
        %s211 = sand.u32 %s97, 1
        %s212 = smul.addr %s211, 16
        %s213 = scalar_lea.vmem [#allocation8], %s212
        %v214 = vld [vmem:[%s183] sm:$0xff]
        %v216 = vcombine.high %v214, %v214
        %vm218 = vcmask 1043456
        %v219 = vsel %vm218, %v214, 0.0
        %v220 = vsel %vm218, %v216, 0.0
        %v221 = vadd.f32 %v219, %v220
        %222 = vadd.xlane.f32.xlu0 %v221
        %v223 = vpop.xlane.xlu0 %222
        %v224 = vmul.f32 %v214, %v214
        %v226 = vcombine.high %v224, %v224
        %v228 = vsel %vm218, %v224, 0.0
        %v229 = vsel %vm218, %v226, 0.0
        %v230 = vadd.f32 %v228, %v229
        %231 = vadd.xlane.f32.xlu0 %v230
        %v232 = vpop.xlane.xlu0 %231
        %v233 = vmul.f32 %v223, 0.00390625
        %v234 = vmul.f32 %v232, 0.00390625
        %v235 = vmul.f32 %v233, %v233
        %v236 = vsub.f32 %v234, %v235
        %v237 = vmax.f32 %v236, 0.0
        %v240 = vunpack.c.l.s4 839922192
        %v241 = vunpack.c.0.s8 %v240
        %v242 = vlaneseq
        %v243 = vshrl.u32 %v242, 7
        %v244 = vsub.s32 %v241, %v243
        %v245 = vrot.slane %v233, %v244
        %v247 = vsub.f32 %v214, %v245
        %v248 = vadd.f32 %v237, 1e-05
        %v249 = vrsqrt.pop %v248
        %v252 = vunpack.c.l.s4 839922192
        %v253 = vunpack.c.0.s8 %v252
        %v254 = vlaneseq
        %v255 = vshrl.u32 %v254, 7
        %v256 = vsub.s32 %v253, %v255
        %v257 = vrot.slane %v249, %v256
        %v259 = vmul.f32 %v247, %v257
        %v260 = vmax.f32 %v259, 0.0
        %v262 = vcombine.high %v260, %v260
        %264 = vrot.lane.b32.xlu0 %v260, 17
        %v265 = vpop.permute.xlu0 %264
        %266 = vrot.lane.b32.xlu0 %v262, 17
        %v267 = vpop.permute.xlu0 %266
        %v268 = vlaneseq
        %v269 = vand.u32 %v268, 127
        %vm270 = vcmp.lt.s32.totalorder %v269, 17
        %v271 = vsel %vm270, %v265, %v267
        %v272 = vsel %vm270, %v267, %v265
        %273 = vrot.lane.b32.xlu0 %v260, 16
        %v274 = vpop.permute.xlu0 %273
        %275 = vrot.lane.b32.xlu0 %v262, 16
        %v276 = vpop.permute.xlu0 %275
        %vm277 = vcmp.lt.s32.totalorder %v269, 16
        %v278 = vsel %vm277, %v274, %v276
        %v279 = vsel %vm277, %v276, %v274
        %280 = vrot.lane.b32.xlu0 %v260, 15
        %v281 = vpop.permute.xlu0 %280
        %282 = vrot.lane.b32.xlu0 %v262, 15
        %v283 = vpop.permute.xlu0 %282
        %vm284 = vcmp.lt.s32.totalorder %v269, 15
        %v285 = vsel %vm284, %v281, %v283
        %v286 = vsel %vm284, %v283, %v281
        %287 = vrot.lane.b32.xlu0 %v260, 1
        %v288 = vpop.permute.xlu0 %287
        %289 = vrot.lane.b32.xlu0 %v262, 1
        %v290 = vpop.permute.xlu0 %289
        %vm291 = vcmp.lt.s32.totalorder %v269, 1
        %v292 = vsel %vm291, %v288, %v290
        %v293 = vsel %vm291, %v290, %v288
        %294 = vrot.lane.b32.xlu0 %v260, 127
        %v295 = vpop.permute.xlu0 %294
        %296 = vrot.lane.b32.xlu0 %v262, 127
        %v297 = vpop.permute.xlu0 %296
        %vm298 = vcmp.lt.s32.totalorder %v269, 127
        %v299 = vsel %vm298, %v295, %v297
        %v300 = vsel %vm298, %v297, %v295
        %301 = vrot.lane.b32.xlu0 %v260, 113
        %v302 = vpop.permute.xlu0 %301
        %303 = vrot.lane.b32.xlu0 %v262, 113
        %v304 = vpop.permute.xlu0 %303
        %vm305 = vcmp.lt.s32.totalorder %v269, 113
        %v306 = vsel %vm305, %v302, %v304
        %v307 = vsel %vm305, %v304, %v302
        %308 = vrot.lane.b32.xlu0 %v260, 112
        %v309 = vpop.permute.xlu0 %308
        %310 = vrot.lane.b32.xlu0 %v262, 112
        %v311 = vpop.permute.xlu0 %310
        %vm312 = vcmp.lt.s32.totalorder %v269, 112
        %v313 = vsel %vm312, %v309, %v311
        %v314 = vsel %vm312, %v311, %v309
        %315 = vrot.lane.b32.xlu0 %v260, 111
        %v316 = vpop.permute.xlu0 %315
        %317 = vrot.lane.b32.xlu0 %v262, 111
        %v318 = vpop.permute.xlu0 %317
        %vm319 = vcmp.lt.s32.totalorder %v269, 111
        %v320 = vsel %vm319, %v316, %v318
        %v321 = vsel %vm319, %v318, %v316
        %v324 = vrot.slane %v279, 4
        %v325 = vrot.slane %v278, 4
        %v330 = vrot.slane %v293, 4
        %v331 = vrot.slane %v292, 4
        %v336 = vrot.slane %v299, 4
        %v337 = vrot.slane %v300, 4
        %v342 = vrot.slane %v313, 4
        %v343 = vrot.slane %v314, 4
        %v346 = vsel %vm218, %v272, %v324
        %v347 = vsel %vm218, %v271, %v325
        %v348 = vsel %vm218, %v286, %v330
        %v349 = vsel %vm218, %v285, %v331
        %v350 = vsel %vm218, %v260, %v336
        %v351 = vsel %vm218, %v262, %v337
        %v352 = vsel %vm218, %v306, %v342
        %v353 = vsel %vm218, %v307, %v343
        %v354 = vld [vmem:[#allocation7] sm:$0xff]
        %v355 = vld [vmem:[#allocation7 + $0x8] sm:$0xff]
        %v356 = vld [vmem:[#allocation7 + $0x10] sm:$0xff]
        %v357 = vld [vmem:[#allocation7 + $0x18] sm:$0xff]
        %v358 = vld [vmem:[#allocation7 + $0x20] sm:$0xff]
        %v359 = vld [vmem:[#allocation7 + $0x28] sm:$0xff]
        %v360 = vld [vmem:[#allocation7 + $0x30] sm:$0xff]
        %v361 = vld [vmem:[#allocation7 + $0x38] sm:$0xff]
        %v362 = vld [vmem:[#allocation7 + $0x40] sm:$0xf]
        %v363 = vld [vmem:[#allocation7 + $0x48] sm:$0xf]
        %v364 = vmul.f32 %v346, %v354
        %v365 = vmul.f32 %v347, %v355
        %v366 = vmul.f32 %v348, %v356
        %v367 = vmul.f32 %v349, %v357
        %v368 = vmul.f32 %v350, %v358
        %v369 = vmul.f32 %v351, %v359
        %v370 = vmul.f32 %v352, %v360
        %v371 = vmul.f32 %v353, %v361
        %v372 = vmul.f32 %v320, %v362
        %v373 = vmul.f32 %v321, %v363
        %v374 = vld [vmem:[#allocation5] sm:$0xff]
        %vm375 = vcmask 293888
        %v377 = vsel %vm375, %v374, 0
        %v380 = vsel %vm218, %v372, 0
        %v383 = vsel %vm218, %v373, 0
        %385 = vmatprep.subr.mxu0 0.0
        %386 = vmatpush1.msra.mxu0 0.0
        %387 = vmatprep.subr.mxu0 0.0
        %388 = vmatpush1.msra.mxu0 0.0
        %389 = vmatprep.subr.mxu0 0.0
        %390 = vmatpush1.msra.mxu0 0.0
        %391 = vmatprep.subr.mxu0 0.0
        %392 = vmatpush1.msra.mxu0 0.0
        %393 = vmatprep.subr.mxu0 0.0
        %394 = vmatpush1.msra.mxu0 0.0
        %395 = vmatprep.subr.mxu0 0.0
        %396 = vmatpush1.msra.mxu0 0.0
        %397 = vmatprep.subr.mxu0 0.0
        %398 = vmatpush1.msra.mxu0 0.0
        %399 = vmatprep.subr.mxu0 0.0
        %400 = vmatpush1.msra.mxu0 0.0
        %401 = vmatprep.subr.mxu0 0.0
        %402 = vmatpush1.msra.mxu0 0.0
        %403 = vmatprep.subr.mxu0 0.0
        %404 = vmatpush1.msra.mxu0 0.0
        %405 = vmatprep.subr.mxu0 0.0
        %406 = vmatpush1.msra.mxu0 0.0
        %407 = vmatprep.subr.mxu0 %v383
        %408 = vmatpush1.msra.mxu0 %v380
        %409 = vmatprep.subr.mxu0 %v371
        %410 = vmatpush1.msra.mxu0 %v370
        %411 = vmatprep.subr.mxu0 %v369
        %412 = vmatpush1.msra.mxu0 %v368
        %413 = vmatprep.subr.mxu0 %v367
        %414 = vmatpush1.msra.mxu0 %v366
        %415 = vmatprep.subr.mxu0 %v365
        %416 = vmatpush1.msra.mxu0 %v364
        %417 = vmatprep.subr.mxu0 0.0
        %418 = vmatpush2.msra.mxu0 0.0
        %419 = vmatprep.subr.mxu0 0.0
        %420 = vmatpush2.msra.mxu0 0.0
        %421 = vmatprep.subr.mxu0 0.0
        %422 = vmatpush2.msra.mxu0 0.0
        %423 = vmatprep.subr.mxu0 0.0
        %424 = vmatpush2.msra.mxu0 0.0
        %425 = vmatprep.subr.mxu0 0.0
        %426 = vmatpush2.msra.mxu0 0.0
        %427 = vmatprep.subr.mxu0 0.0
        %428 = vmatpush2.msra.mxu0 0.0
        %429 = vmatprep.subr.mxu0 0.0
        %430 = vmatpush2.msra.mxu0 0.0
        %431 = vmatprep.subr.mxu0 0.0
        %432 = vmatpush2.msra.mxu0 0.0
        %433 = vmatprep.subr.mxu0 0.0
        %434 = vmatpush2.msra.mxu0 0.0
        %435 = vmatprep.subr.mxu0 0.0
        %436 = vmatpush2.msra.mxu0 0.0
        %437 = vmatprep.subr.mxu0 0.0
        %438 = vmatpush2.msra.mxu0 0.0
        %439 = vmatprep.subr.mxu0 0.0
        %440 = vmatpush2.msra.mxu0 0.0
        %441 = vmatprep.subr.mxu0 0.0
        %442 = vmatpush2.msra.mxu0 0.0
        %443 = vmatprep.subr.mxu0 0.0
        %444 = vmatpush2.msra.mxu0 0.0
        %445 = vmatprep.subr.mxu0 0.0
        %446 = vmatpush2.msra.mxu0 0.0
        %447 = vmatprep.subr.mxu0 0.0
        %448 = vmatpush2.msra.mxu0 0.0
        %449 = vmatprep.mubr.f32.mxu0 0.0
        %450 = vmatmul.mubr.f32.gmra.mxu0 %v377
        %v451 = vpop.f32.mrf.mxu0
        %v452 = vadd.f32 0.0, %v451
        %v453 = vpop.f32.mrf.mxu0
        %v454 = vadd.f32 0.0, %v453
        %455 = vdwg.mxu0
        %456 = vst [vmem:[%s213] sm:$0xff] %v452
        %457 = vst [vmem:[%s213 + $0x8] sm:$0xff] %v454
        %s458 = sand.u32 %s97, 1
        %s459 = scalar_lea.sflag [#allocation4], %s458
        %s460 = sand.u32 %s97, 1
        %s461 = smul.addr %s460, 16
        %s462 = scalar_lea.vmem [#allocation8], %s461
        // Predicated region
        $region45: #{tpu_custom_call.1} parent=31 // pred_check
          %p463 = pneg %p107
        $region46: #{tpu_custom_call.1} parent=31 // pred_check_branch
          %465 = sbr.rel (%p463) target = $region48
        $region47: #{tpu_custom_call.1} parent=31 // pred_region
          %s467 = ssub.s32 256, 256
          %468 = vsyncadd %s459, %s467
          %s469 = smul.addr %s21, 2
          %s470 = smul.addr %s469, 128
          %s471 = scalar_lea.hbm %s3, %s470
          %s473 = sshll.u32 %s462, 4
          %s474 = int_to_ptr.vmem [resolvable:$true] %s473
          %476 = dma.vmem_to_hbm [thread:$0]  %s474, 256, %s471, %s459
        $region48: #{tpu_custom_call.1} parent=31 // pred_fallthru
          _
      $region32: #{tpu_custom_call.1} parent=5 // pred_fallthru
        _
      %p477 = scmp.le.s32.totalorder 2, %s16
      // Predicated region
      $region49: #{tpu_custom_call.1} parent=5 // pred_check
        %p478 = pneg %p477
      $region50: #{tpu_custom_call.1} parent=5 // pred_check_branch
        %480 = sbr.rel (%p478) target = $region52
      $region51: #{tpu_custom_call.1} parent=5 // pred_region
        %s481 = ssub.s32 %s16, 2
        // Predicated region
        $region53: #{tpu_custom_call.1} parent=51 // pred_check
          %p482 = pneg %p113
        $region54: #{tpu_custom_call.1} parent=51 // pred_check_branch
          %484 = sbr.rel (%p482) target = $region56
        $region55: #{tpu_custom_call.1} parent=51 // pred_region
          %s485 = sand.u32 %s98, 1
          %s486 = scalar_lea.sflag [#allocation4], %s485
          %s487 = sand.u32 %s98, 1
          %s488 = smul.addr %s487, 16
          %s489 = scalar_lea.vmem [#allocation8], %s488
          %490 = dma.done %s486, 256
        $region56: #{tpu_custom_call.1} parent=51 // pred_fallthru
          _
      $region52: #{tpu_custom_call.1} parent=5 // pred_fallthru
        _
    $region6: #{tpu_custom_call.1} parent=1 // loop_footer
      %s20 = sadd.s32 1, %s16
    $region7: #{tpu_custom_call.1} parent=1 // loop_footer_branch
      %15 = sbr.rel target = $region3
    $region8: #{tpu_custom_call.1} parent=1 // loop_exit
      _
    %491 = vsyncpa [#allocation3], 1
    %s492 = scalar_lea.sflag [#allocation3], 1
    %493 = vsyncpa %s492, 1
    %494 = vsyncpa [#allocation6], 1
    %495 = vsyncpa [#allocation4], 1
    %s496 = scalar_lea.sflag [#allocation4], 1
    %497 = vsyncpa %s496, 1

</llo_original>
